<compile_context>
chip_gen: v7x
topology: tpu7x:2x2x1
jax: 0.10.0
libtpu: 0.0.40
codegen_flags: <defaults>
</compile_context>

<pallas_src>
import jax
import jax.numpy as jnp
from jax.experimental import pallas as pl
from jax.experimental.pallas import tpu as pltpu


def _patch_embed_kernel(patches_ref, wt_ref, table_ref, out_ref):
    # patches_ref: (TB*(N+1), Kp) bf16   (row 0 of each batch is the all-zero cls patch)
    # wt_ref:      (Kp, E)        bf16   (grid-invariant)
    # table_ref:   (TB*(N+1), E)  f32    (grid-invariant: cls+pos[0] / pos[i]+bias, pre-tiled)
    # out_ref:     (TB*(N+1), E)  final dtype
    proj = jnp.dot(patches_ref[...], wt_ref[...], preferred_element_type=jnp.float32)
    out_ref[...] = (proj + table_ref[...]).astype(out_ref.dtype)


def _vmem_budget_and_limit():
    """Generation-aware VMEM sizing (v7x has 64 MiB physical vs 128 MiB on v5e/v6e)."""
    cap = 64 * 1024 * 1024  # conservative default = v7x per-core physical VMEM
    try:
        info = pltpu.get_tpu_info()
        cap = int(getattr(info, "vmem_capacity_bytes", cap)) or cap
    except Exception:
        pass
    budget = int(cap * 0.40)                                   # drives tile selection
    limit = max(32 * 1024 * 1024, min(int(cap * 0.70), 100 * 1024 * 1024))
    return budget, limit


def _pick_batch_tile(B, rows_per_batch, Kp, E, out_bytes, budget):
    """Pick the batch tile TB.
    Hard constraints:
      - (TB*rows_per_batch) % 8 == 0 or TB == B   (sublane rule for the block row dim)
      - all resident VMEM fits the budget (double-buffered patches/out blocks,
        single-buffered weight + additive table, live f32 matmul result)
    Preferences (perf review): >=2 grid steps (megacore / DMA overlap), >=512 matmul rows
    per step, no partial last block when a divisor works, otherwise the largest tile."""
    def rows(tb):
        return tb * rows_per_batch

    def vmem(tb):
        return (2 * rows(tb) * Kp * 2            # patches block (bf16), double-buffered
                + 2 * rows(tb) * E * out_bytes   # output block, double-buffered
                + Kp * E * 2                     # weight^T (bf16), single-buffered
                + rows(tb) * E * 4               # additive table (f32), single-buffered
                + rows(tb) * E * 4)              # live f32 matmul result

    def aligned(tb):
        return tb == B or rows(tb) % 8 == 0

    cands = [tb for tb in range(1, B + 1) if aligned(tb) and vmem(tb) <= budget]
    if not cands:                                # nothing under budget: smallest legal tile
        return min(tb for tb in range(1, B + 1) if aligned(tb))
    multi = [tb for tb in cands if pl.cdiv(B, tb) >= 2] or cands
    big = [tb for tb in multi if rows(tb) >= 512]
    pool = big or multi
    divs = [tb for tb in pool if B % tb == 0] or pool
    return min(divs) if big else max(divs)


def patch_embedding(x, weight, bias, cls_token, pos_embedding, patch_size):
    """x: (B, C, H, W), weight: (E, C, p, p), bias: (E,), cls_token: (1, 1, E),
    pos_embedding: (1, N+1, E).  Returns (B, N+1, E) in x.dtype."""
    B, C, H, W = x.shape
    E = weight.shape[0]
    p = patch_size
    Hp, Wp = H // p, W // p
    N = Hp * Wp
    K = C * p * p
    assert pos_embedding.shape[1] == N + 1, "pos embedding size must match num_patches+1"
    out_dtype = x.dtype
    out_bytes = jnp.dtype(out_dtype).itemsize
    rows_per_batch = N + 1
    Kp = ((K + 127) // 128) * 128                # lane-dense MXU feed (zero cols are a no-op)

    # --- glue: patchify + prepend the all-zero cls-patch row (one XLA pass) ------------------
    # TODO(synk): fuse this space-to-depth transpose into the kernel's input side (grid over
    # (batch, Hp) with a (TB, C, p, W) block + in-VMEM reorder) to save one HBM round trip of x;
    # biggest relative win on v5e's ~820 GB/s HBM.
    patches = (x.reshape(B, C, Hp, p, Wp, p)
                 .transpose(0, 2, 4, 1, 3, 5)
                 .reshape(B, N, K)
                 .astype(jnp.bfloat16))
    patches = jnp.pad(patches, ((0, 0), (1, 0), (0, Kp - K)))
    patches = patches.reshape(B * rows_per_batch, Kp)

    wt = weight.reshape(E, K).T.astype(jnp.bfloat16)           # (K, E)
    if Kp != K:
        wt = jnp.pad(wt, ((0, Kp - K), (0, 0)))

    pos = pos_embedding.reshape(N + 1, E).astype(jnp.float32)
    bias_f32 = bias.astype(jnp.float32)
    cls_f32 = cls_token.reshape(1, E).astype(jnp.float32)
    table = jnp.concatenate([cls_f32 + pos[:1], pos[1:] + bias_f32[None, :]], axis=0)  # (N+1, E)

    budget, vmem_limit = _vmem_budget_and_limit()
    TB = _pick_batch_tile(B, rows_per_batch, Kp, E, out_bytes, budget)
    grid = (pl.cdiv(B, TB),)
    block_rows = TB * rows_per_batch
    table_tiled = jnp.tile(table, (TB, 1))                     # (TB*(N+1), E), grid-invariant

    def build(single_buffer_invariants):
        if single_buffer_invariants:
            def inv_spec(shape):
                # Grid-invariant operand: constant index_map never re-DMAs; single-buffer it so
                # its double-buffer reservation doesn't eat into the batch tile.
                return pl.BlockSpec(shape, lambda b: (0, 0), pipeline_mode=pl.Buffered(1))
        else:
            def inv_spec(shape):
                return pl.BlockSpec(shape, lambda b: (0, 0))
        return pl.pallas_call(
            _patch_embed_kernel,
            out_shape=jax.ShapeDtypeStruct((B * rows_per_batch, E), out_dtype),
            grid_spec=pltpu.PrefetchScalarGridSpec(
                num_scalar_prefetch=0,
                grid=grid,
                in_specs=[
                    pl.BlockSpec((block_rows, Kp), lambda b: (b, 0)),   # patches (batch folded in M)
                    inv_spec((Kp, E)),                                  # weight^T
                    inv_spec((block_rows, E)),                          # additive table
                ],
                out_specs=pl.BlockSpec((block_rows, E), lambda b: (b, 0)),
            ),
            compiler_params=pltpu.CompilerParams(
                dimension_semantics=("parallel",),
                vmem_limit_bytes=vmem_limit),
        )

    try:
        out2d = build(True)(patches, wt, table_tiled)
    except Exception:
        # Fallback for jax versions without BlockSpec(pipeline_mode=...): default double buffering.
        out2d = build(False)(patches, wt, table_tiled)

    return out2d.reshape(B, N + 1, E)          # row-major reshape: metadata only, no extra pass


def _reference(x, weight, bias, cls_token, pos_embedding, patch_size):
    """Pure-JAX f32 reference mirroring the PyTorch forward."""
    B, C, H, W = x.shape
    E = weight.shape[0]
    p = patch_size
    Hp, Wp = H // p, W // p
    N = Hp * Wp
    patches = x.reshape(B, C, Hp, p, Wp, p).transpose(0, 2, 4, 1, 3, 5).reshape(B, N, C * p * p)
    proj = patches @ weight.reshape(E, -1).T + bias              # (B, N, E)
    cls = jnp.broadcast_to(cls_token, (B, 1, E))
    return jnp.concatenate([cls, proj], axis=1) + pos_embedding


if __name__ == "__main__":
    # Small, module-consistent shapes.
    B, C, H, W = 2, 4, 16, 16
    patch_size = 4
    emb_size = 32
    Hp, Wp = H // patch_size, W // patch_size
    num_patches = Hp * Wp                        # 16 -> pos_embedding matches, no re-init branch

    key = jax.random.PRNGKey(0)
    kx, kw, kb, kc, kpos = jax.random.split(key, 5)
    x = jax.random.normal(kx, (B, C, H, W), dtype=jnp.float32)
    weight = jax.random.normal(kw, (emb_size, C, patch_size, patch_size), dtype=jnp.float32) * 0.02
    bias = jax.random.normal(kb, (emb_size,), dtype=jnp.float32) * 0.02
    cls_token = jax.random.normal(kc, (1, 1, emb_size), dtype=jnp.float32)
    pos_embedding = jax.random.normal(kpos, (1, num_patches + 1, emb_size), dtype=jnp.float32)

    out = patch_embedding(x, weight, bias, cls_token, pos_embedding, patch_size)
    out = jax.block_until_ready(out)

    ref = _reference(x, weight, bias, cls_token, pos_embedding, patch_size)
    assert out.shape == (B, num_patches + 1, emb_size)
    assert out.dtype == x.dtype
    # Kernel uses bf16 MXU inputs with f32 accumulation -> tolerance reflects bf16 input rounding.
    assert jnp.allclose(out, ref, atol=2e-2, rtol=2e-2), float(jnp.max(jnp.abs(out - ref)))

    print("KERNEL_OK")
</pallas_src>

<mosaic_0001>
module attributes {stable_mosaic.version = 11 : i64} {
  func.func @_patch_embed_kernel(%arg0: i32, %arg1: memref<34x128xbf16, #tpu.memory_space<vmem>>, %arg2: memref<128x32xbf16, #tpu.memory_space<vmem>>, %arg3: memref<34x32xf32, #tpu.memory_space<vmem>>, %arg4: memref<34x32xf32, #tpu.memory_space<vmem>>) attributes {dimension_semantics = [#tpu.dimension_semantics<parallel>], iteration_bounds = array<i64: 1>, scalar_prefetch = 0 : i64, scratch_operands = 0 : i64, tpu.core_type = #tpu.core_type<tc>, window_params = [{transform_indices = @transform_0, window_bounds = array<i64: 34, 128>}, {pipeline_mode = #tpu.pipeline_mode<synchronous>, transform_indices = @transform_1, window_bounds = array<i64: 128, 32>}, {pipeline_mode = #tpu.pipeline_mode<synchronous>, transform_indices = @transform_2, window_bounds = array<i64: 34, 32>}, {transform_indices = @transform_3, window_bounds = array<i64: 34, 32>}]} {
    %c0 = arith.constant 0 : index
    %c0_0 = arith.constant 0 : index
    %0 = vector.load %arg1[%c0, %c0_0] : memref<34x128xbf16, #tpu.memory_space<vmem>>, vector<34x128xbf16>
    %c0_1 = arith.constant 0 : index
    %c0_2 = arith.constant 0 : index
    %1 = vector.load %arg2[%c0_1, %c0_2] : memref<128x32xbf16, #tpu.memory_space<vmem>>, vector<128x32xbf16>
    %cst = arith.constant dense<0.000000e+00> : vector<34x32xf32>
    %2 = tpu.matmul %0, %1, %cst {dimension_numbers = #tpu.dot_dimension_numbers<[1], [0], [0], [1], [0, 0, 1, 1], [], []>} : vector<34x128xbf16>, vector<128x32xbf16>, vector<34x32xf32> -> vector<34x32xf32>
    %c0_3 = arith.constant 0 : index
    %c0_4 = arith.constant 0 : index
    %3 = vector.load %arg3[%c0_3, %c0_4] : memref<34x32xf32, #tpu.memory_space<vmem>>, vector<34x32xf32>
    %4 = arith.addf %2, %3 : vector<34x32xf32>
    %c0_5 = arith.constant 0 : index
    %c0_6 = arith.constant 0 : index
    %5 = vector.load %arg4[%c0_5, %c0_6] : memref<34x32xf32, #tpu.memory_space<vmem>>, vector<34x32xf32>
    tpu.vector_store %arg4[%c0_5, %c0_6], %4 {strides = array<i32>} : memref<34x32xf32, #tpu.memory_space<vmem>>, vector<34x32xf32>,
    return
  }
  func.func @transform_0(%arg0: i32) -> (i32, i32) {
    %c0_i32 = arith.constant 0 : i32
    %c0_i32_0 = arith.constant 0 : i32
    return %arg0, %c0_i32 : i32, i32
  }
  func.func @transform_1(%arg0: i32) -> (i32, i32) {
    %c0_i32 = arith.constant 0 : i32
    %c0_i32_0 = arith.constant 0 : i32
    %c0_i32_1 = arith.constant 0 : i32
    return %c0_i32, %c0_i32_0 : i32, i32
  }
  func.func @transform_2(%arg0: i32) -> (i32, i32) {
    %c0_i32 = arith.constant 0 : i32
    %c0_i32_0 = arith.constant 0 : i32
    %c0_i32_1 = arith.constant 0 : i32
    return %c0_i32, %c0_i32_0 : i32, i32
  }
  func.func @transform_3(%arg0: i32) -> (i32, i32) {
    %c0_i32 = arith.constant 0 : i32
    %c0_i32_0 = arith.constant 0 : i32
    return %arg0, %c0_i32 : i32, i32
  }
}

module attributes {stable_mosaic.version = 11 : i64} {
  func.func @_patch_embed_kernel(%arg0: i32, %arg1: memref<34x128xbf16, #tpu.memory_space<vmem>>, %arg2: memref<128x32xbf16, #tpu.memory_space<vmem>>, %arg3: memref<34x32xf32, #tpu.memory_space<vmem>>, %arg4: memref<34x32xf32, #tpu.memory_space<vmem>>) attributes {dimension_semantics = [#tpu.dimension_semantics<parallel>], iteration_bounds = array<i64: 1>, scalar_prefetch = 0 : i64, scratch_operands = 0 : i64, tpu.core_type = #tpu.core_type<tc>, window_params = [{transform_indices = @transform_0, window_bounds = array<i64: 34, 128>}, {pipeline_mode = #tpu.pipeline_mode<synchronous>, transform_indices = @transform_1, window_bounds = array<i64: 128, 32>}, {pipeline_mode = #tpu.pipeline_mode<synchronous>, transform_indices = @transform_2, window_bounds = array<i64: 34, 32>}, {transform_indices = @transform_3, window_bounds = array<i64: 34, 32>}]} {
    %c0 = arith.constant 0 : index
    %c0_0 = arith.constant 0 : index
    %0 = vector.load %arg1[%c0, %c0_0] : memref<34x128xbf16, #tpu.memory_space<vmem>>, vector<34x128xbf16>
    %c0_1 = arith.constant 0 : index
    %c0_2 = arith.constant 0 : index
    %1 = vector.load %arg2[%c0_1, %c0_2] : memref<128x32xbf16, #tpu.memory_space<vmem>>, vector<128x32xbf16>
    %cst = arith.constant dense<0.000000e+00> : vector<34x32xf32>
    %2 = tpu.matmul %0, %1, %cst {dimension_numbers = #tpu.dot_dimension_numbers<[1], [0], [0], [1], [0, 0, 1, 1], [], []>} : vector<34x128xbf16>, vector<128x32xbf16>, vector<34x32xf32> -> vector<34x32xf32>
    %c0_3 = arith.constant 0 : index
    %c0_4 = arith.constant 0 : index
    %3 = vector.load %arg3[%c0_3, %c0_4] : memref<34x32xf32, #tpu.memory_space<vmem>>, vector<34x32xf32>
    %4 = arith.addf %2, %3 : vector<34x32xf32>
    %c0_5 = arith.constant 0 : index
    %c0_6 = arith.constant 0 : index
    %5 = vector.load %arg4[%c0_5, %c0_6] : memref<34x32xf32, #tpu.memory_space<vmem>>, vector<34x32xf32>
    tpu.vector_store %arg4[%c0_5, %c0_6], %4 {strides = array<i32>} : memref<34x32xf32, #tpu.memory_space<vmem>>, vector<34x32xf32>,
    return
  }
  func.func @transform_0(%arg0: i32) -> (i32, i32) {
    %c0_i32 = arith.constant 0 : i32
    %c0_i32_0 = arith.constant 0 : i32
    return %arg0, %c0_i32 : i32, i32
  }
  func.func @transform_1(%arg0: i32) -> (i32, i32) {
    %c0_i32 = arith.constant 0 : i32
    %c0_i32_0 = arith.constant 0 : i32
    %c0_i32_1 = arith.constant 0 : i32
    return %c0_i32, %c0_i32_0 : i32, i32
  }
  func.func @transform_2(%arg0: i32) -> (i32, i32) {
    %c0_i32 = arith.constant 0 : i32
    %c0_i32_0 = arith.constant 0 : i32
    %c0_i32_1 = arith.constant 0 : i32
    return %c0_i32, %c0_i32_0 : i32, i32
  }
  func.func @transform_3(%arg0: i32) -> (i32, i32) {
    %c0_i32 = arith.constant 0 : i32
    %c0_i32_0 = arith.constant 0 : i32
    return %arg0, %c0_i32 : i32, i32
  }
}

</mosaic_0001>

<llo_original>
// kernel: tpu_custom_call.1
$region0: #{tpu_custom_call.1}
  #allocation0 [shape = 'u32[]', space=smem, size = 0x4, offset = 0x4, fixed_abs, tag = 'smem constant byte address 0x4 - core index']
  #allocation1 [shape = 'u32[144,128]{1,0:T(1,128)}', space=vmem, size = 0x12000, scoped, tag = 'internal scratch']
  %s0 = inlined_call_operand.vmem [shape: bf16[34,128], index: 0, kind: input, shape index: {}]
  %s1 = inlined_call_operand.vmem [shape: bf16[128,32], index: 1, kind: input, shape index: {}]
  %s2 = inlined_call_operand.vmem [shape: f32[34,32], index: 2, kind: input, shape index: {}]
  %s3 = inlined_call_operand.vmem [shape: f32[34,32], index: 3, kind: output, shape index: {}]
  %s4 = sld [smem:[#allocation0]]
  $region22: #{tpu_custom_call.1} parent=0
    _
  %s6 = ssub.s32 1, %s4
  %s7 = scalar_select 0, %s6, %s4
  // Predicated region
  $region2: #{tpu_custom_call.1} parent=0 // pred_check
    _
  $region3: #{tpu_custom_call.1} parent=0 // pred_check_branch
    %9 = sbr.rel (0) target = $region5
  $region4: #{tpu_custom_call.1} parent=0 // pred_region
    _
  $region5: #{tpu_custom_call.1} parent=0 // pred_fallthru
    _
  // Predicated region
  $region6: #{tpu_custom_call.1} parent=0 // pred_check
    _
  $region7: #{tpu_custom_call.1} parent=0 // pred_check_branch
    %11 = sbr.rel (0) target = $region9
  $region8: #{tpu_custom_call.1} parent=0 // pred_region
    _
  $region9: #{tpu_custom_call.1} parent=0 // pred_fallthru
    _
  // Predicated region
  $region10: #{tpu_custom_call.1} parent=0 // pred_check
    _
  $region11: #{tpu_custom_call.1} parent=0 // pred_check_branch
    %13 = sbr.rel (0) target = $region13
  $region12: #{tpu_custom_call.1} parent=0 // pred_region
    _
  $region13: #{tpu_custom_call.1} parent=0 // pred_fallthru
    _
  %v15 = vld [vmem:[%s0] sm:$0xf]
  %v16 = vld [vmem:[%s0 + $0x4] sm:$0xf]
  %v17 = vld [vmem:[%s0 + $0x8] sm:$0xf]
  %v18 = vld [vmem:[%s0 + $0xc] sm:$0xf]
  %v19 = vld [vmem:[%s0 + $0x10] sm:$0x1]
  %v20 = vld [vmem:[%s1] sm:$0xf]
  %v21 = vld [vmem:[%s1 + $0x4] sm:$0xf]
  %v22 = vld [vmem:[%s1 + $0x8] sm:$0xf]
  %v23 = vld [vmem:[%s1 + $0xc] sm:$0xf]
  %v24 = vld [vmem:[%s1 + $0x10] sm:$0xf]
  %v25 = vld [vmem:[%s1 + $0x14] sm:$0xf]
  %v26 = vld [vmem:[%s1 + $0x18] sm:$0xf]
  %v27 = vld [vmem:[%s1 + $0x1c] sm:$0xf]
  %v28 = vld [vmem:[%s1 + $0x20] sm:$0xf]
  %v29 = vld [vmem:[%s1 + $0x24] sm:$0xf]
  %v30 = vld [vmem:[%s1 + $0x28] sm:$0xf]
  %v31 = vld [vmem:[%s1 + $0x2c] sm:$0xf]
  %v32 = vld [vmem:[%s1 + $0x30] sm:$0xf]
  %v33 = vld [vmem:[%s1 + $0x34] sm:$0xf]
  %v34 = vld [vmem:[%s1 + $0x38] sm:$0xf]
  %v35 = vld [vmem:[%s1 + $0x3c] sm:$0xf]
  %v36 = vld [vmem:[%s2] sm:$0xff]
  %v37 = vld [vmem:[%s2 + $0x8] sm:$0xff]
  %v38 = vld [vmem:[%s2 + $0x10] sm:$0xff]
  %v39 = vld [vmem:[%s2 + $0x18] sm:$0xff]
  %v40 = vld [vmem:[%s2 + $0x20] sm:$0x3]
  %v46 = vunpack.c.l.b16 %v15
  %v47 = vunpack.c.l.b16 %v16
  %v48 = vunpack.c.l.b16 %v17
  %v49 = vunpack.c.l.b16 %v18
  %v50 = vunpack.c.l.b16 %v19
  %v51 = vpack.c.b16 %v47, %v46
  %v52 = vpack.c.b16 %v49, %v48
  %v53 = vpack.c.b16 %v50, %v50
  %v73 = vunpack.c.l.b16 %v20
  %v74 = vunpack.c.l.b16 %v21
  %v75 = vunpack.c.l.b16 %v22
  %v76 = vunpack.c.l.b16 %v23
  %v77 = vunpack.c.l.b16 %v24
  %v78 = vunpack.c.l.b16 %v25
  %v79 = vunpack.c.l.b16 %v26
  %v80 = vunpack.c.l.b16 %v27
  %v81 = vunpack.c.l.b16 %v28
  %v82 = vunpack.c.l.b16 %v29
  %v83 = vunpack.c.l.b16 %v30
  %v84 = vunpack.c.l.b16 %v31
  %v85 = vunpack.c.l.b16 %v32
  %v86 = vunpack.c.l.b16 %v33
  %v87 = vunpack.c.l.b16 %v34
  %v88 = vunpack.c.l.b16 %v35
  %v89 = vpack.c.b16 %v74, %v73
  %v90 = vpack.c.b16 %v76, %v75
  %v91 = vpack.c.b16 %v78, %v77
  %v92 = vpack.c.b16 %v80, %v79
  %v93 = vpack.c.b16 %v82, %v81
  %v94 = vpack.c.b16 %v84, %v83
  %v95 = vpack.c.b16 %v86, %v85
  %v96 = vpack.c.b16 %v88, %v87
  %105 = vmatprep.subr.bf16.mxu0 0
  %106 = vmatpush1.bf16.msra.mxu0 %v89
  %107 = vmatprep.subr.bf16.mxu0 0
  %108 = vmatpush1.bf16.msra.mxu0 %v90
  %109 = vmatprep.subr.bf16.mxu0 0
  %110 = vmatpush1.bf16.msra.mxu0 %v91
  %111 = vmatprep.subr.bf16.mxu0 0
  %112 = vmatpush1.bf16.msra.mxu0 %v92
  %113 = vmatprep.subr.bf16.mxu0 0
  %114 = vmatpush1.bf16.msra.mxu0 %v93
  %115 = vmatprep.subr.bf16.mxu0 0
  %116 = vmatpush1.bf16.msra.mxu0 %v94
  %117 = vmatprep.subr.bf16.mxu0 0
  %118 = vmatpush1.bf16.msra.mxu0 %v95
  %119 = vmatprep.subr.bf16.mxu0 0
  %120 = vmatpush1.bf16.msra.mxu0 %v96
  %121 = vmatprep.subr.bf16.mxu0 0
  %122 = vmatpush1.bf16.msra.mxu0 0
  %123 = vmatprep.subr.bf16.mxu0 0
  %124 = vmatpush1.bf16.msra.mxu0 0
  %125 = vmatprep.subr.bf16.mxu0 0
  %126 = vmatpush1.bf16.msra.mxu0 0
  %127 = vmatprep.subr.bf16.mxu0 0
  %128 = vmatpush1.bf16.msra.mxu0 0
  %129 = vmatprep.subr.bf16.mxu0 0
  %130 = vmatpush1.bf16.msra.mxu0 0
  %131 = vmatprep.subr.bf16.mxu0 0
  %132 = vmatpush1.bf16.msra.mxu0 0
  %133 = vmatprep.subr.bf16.mxu0 0
  %134 = vmatpush1.bf16.msra.mxu0 0
  %135 = vmatprep.subr.bf16.mxu0 0
  %136 = vmatpush1.bf16.msra.mxu0 0
  %137 = vmatprep.mubr.bf16.mxu0 0
  %138 = vmatmul.mubr.bf16.gmra.mrb[0].mxu0 %v51
  %v139 = vpop.f32.mrb[0].mxu0
  %v140 = vadd.f32 %v36, %v139
  %v141 = vpop.f32.mrb[0].mxu0
  %v142 = vpop.f32.mrb[0].mxu0
  %v143 = vadd.f32 %v37, %v142
  %v144 = vpop.f32.mrb[0].mxu0
  %145 = vmatprep.mubr.bf16.mxu0 0
  %146 = vmatmul.mubr.bf16.gmra.mrb[0].mxu0 %v52
  %v147 = vpop.f32.mrb[0].mxu0
  %v148 = vadd.f32 %v38, %v147
  %v149 = vpop.f32.mrb[0].mxu0
  %v150 = vpop.f32.mrb[0].mxu0
  %v151 = vadd.f32 %v39, %v150
  %v152 = vpop.f32.mrb[0].mxu0
  %153 = vmatprep.mubr.bf16.mxu0 0
  %154 = vmatmul.mubr.bf16.gmra.mrb[0].mxu0 %v53
  %v155 = vpop.f32.mrb[0].mxu0
  %v156 = vadd.f32 %v40, %v155
  %v157 = vpop.f32.mrb[0].mxu0
  %v158 = vpop.f32.mrb[0].mxu0
  %v159 = vpop.f32.mrb[0].mxu0
  %160 = vdwg.mxu0
  %vm161 = vcmask 261120
  %162 = vst.msk [vmem:[%s3] sm:$0xff] %vm161, %v140
  %163 = vst.msk [vmem:[%s3 + $0x8] sm:$0xff] %vm161, %v143
  %164 = vst.msk [vmem:[%s3 + $0x10] sm:$0xff] %vm161, %v148
  %165 = vst.msk [vmem:[%s3 + $0x18] sm:$0xff] %vm161, %v151
  %vm166 = vcmask 254976
  %167 = vst.msk [vmem:[%s3 + $0x20] sm:$0x3] %vm166, %v156
  // Predicated region
  $region14: #{tpu_custom_call.1} parent=0 // pred_check
    _
  $region15: #{tpu_custom_call.1} parent=0 // pred_check_branch
    %169 = sbr.rel (0) target = $region17
  $region16: #{tpu_custom_call.1} parent=0 // pred_region
    _
  $region17: #{tpu_custom_call.1} parent=0 // pred_fallthru
    _
  // Predicated region
  $region18: #{tpu_custom_call.1} parent=0 // pred_check
    _
  $region19: #{tpu_custom_call.1} parent=0 // pred_check_branch
    %171 = sbr.rel (0) target = $region21
  $region20: #{tpu_custom_call.1} parent=0 // pred_region
    _
  $region21: #{tpu_custom_call.1} parent=0 // pred_fallthru
    _

// kernel: tpu_custom_call.1
$region0: #{tpu_custom_call.1}
  #allocation0 [shape = 'u32[]', space=smem, size = 0x4, offset = 0x4, fixed_abs, tag = 'smem constant byte address 0x4 - core index']
  #allocation1 [shape = 'u32[144,128]{1,0:T(1,128)}', space=vmem, size = 0x12000, scoped, tag = 'internal scratch']
  %s0 = inlined_call_operand.vmem [shape: bf16[34,128], index: 0, kind: input, shape index: {}]
  %s1 = inlined_call_operand.vmem [shape: bf16[128,32], index: 1, kind: input, shape index: {}]
  %s2 = inlined_call_operand.vmem [shape: f32[34,32], index: 2, kind: input, shape index: {}]
  %s3 = inlined_call_operand.vmem [shape: f32[34,32], index: 3, kind: output, shape index: {}]
  %s4 = sld [smem:[#allocation0]]
  $region22: #{tpu_custom_call.1} parent=0
    _
  %s6 = ssub.s32 1, %s4
  %s7 = scalar_select 0, %s6, %s4
  // Predicated region
  $region2: #{tpu_custom_call.1} parent=0 // pred_check
    _
  $region3: #{tpu_custom_call.1} parent=0 // pred_check_branch
    %9 = sbr.rel (0) target = $region5
  $region4: #{tpu_custom_call.1} parent=0 // pred_region
    _
  $region5: #{tpu_custom_call.1} parent=0 // pred_fallthru
    _
  // Predicated region
  $region6: #{tpu_custom_call.1} parent=0 // pred_check
    _
  $region7: #{tpu_custom_call.1} parent=0 // pred_check_branch
    %11 = sbr.rel (0) target = $region9
  $region8: #{tpu_custom_call.1} parent=0 // pred_region
    _
  $region9: #{tpu_custom_call.1} parent=0 // pred_fallthru
    _
  // Predicated region
  $region10: #{tpu_custom_call.1} parent=0 // pred_check
    _
  $region11: #{tpu_custom_call.1} parent=0 // pred_check_branch
    %13 = sbr.rel (0) target = $region13
  $region12: #{tpu_custom_call.1} parent=0 // pred_region
    _
  $region13: #{tpu_custom_call.1} parent=0 // pred_fallthru
    _
  %v15 = vld [vmem:[%s0] sm:$0xf]
  %v16 = vld [vmem:[%s0 + $0x4] sm:$0xf]
  %v17 = vld [vmem:[%s0 + $0x8] sm:$0xf]
  %v18 = vld [vmem:[%s0 + $0xc] sm:$0xf]
  %v19 = vld [vmem:[%s0 + $0x10] sm:$0x1]
  %v20 = vld [vmem:[%s1] sm:$0xf]
  %v21 = vld [vmem:[%s1 + $0x4] sm:$0xf]
  %v22 = vld [vmem:[%s1 + $0x8] sm:$0xf]
  %v23 = vld [vmem:[%s1 + $0xc] sm:$0xf]
  %v24 = vld [vmem:[%s1 + $0x10] sm:$0xf]
  %v25 = vld [vmem:[%s1 + $0x14] sm:$0xf]
  %v26 = vld [vmem:[%s1 + $0x18] sm:$0xf]
  %v27 = vld [vmem:[%s1 + $0x1c] sm:$0xf]
  %v28 = vld [vmem:[%s1 + $0x20] sm:$0xf]
  %v29 = vld [vmem:[%s1 + $0x24] sm:$0xf]
  %v30 = vld [vmem:[%s1 + $0x28] sm:$0xf]
  %v31 = vld [vmem:[%s1 + $0x2c] sm:$0xf]
  %v32 = vld [vmem:[%s1 + $0x30] sm:$0xf]
  %v33 = vld [vmem:[%s1 + $0x34] sm:$0xf]
  %v34 = vld [vmem:[%s1 + $0x38] sm:$0xf]
  %v35 = vld [vmem:[%s1 + $0x3c] sm:$0xf]
  %v36 = vld [vmem:[%s2] sm:$0xff]
  %v37 = vld [vmem:[%s2 + $0x8] sm:$0xff]
  %v38 = vld [vmem:[%s2 + $0x10] sm:$0xff]
  %v39 = vld [vmem:[%s2 + $0x18] sm:$0xff]
  %v40 = vld [vmem:[%s2 + $0x20] sm:$0x3]
  %v46 = vunpack.c.l.b16 %v15
  %v47 = vunpack.c.l.b16 %v16
  %v48 = vunpack.c.l.b16 %v17
  %v49 = vunpack.c.l.b16 %v18
  %v50 = vunpack.c.l.b16 %v19
  %v51 = vpack.c.b16 %v47, %v46
  %v52 = vpack.c.b16 %v49, %v48
  %v53 = vpack.c.b16 %v50, %v50
  %v73 = vunpack.c.l.b16 %v20
  %v74 = vunpack.c.l.b16 %v21
  %v75 = vunpack.c.l.b16 %v22
  %v76 = vunpack.c.l.b16 %v23
  %v77 = vunpack.c.l.b16 %v24
  %v78 = vunpack.c.l.b16 %v25
  %v79 = vunpack.c.l.b16 %v26
  %v80 = vunpack.c.l.b16 %v27
  %v81 = vunpack.c.l.b16 %v28
  %v82 = vunpack.c.l.b16 %v29
  %v83 = vunpack.c.l.b16 %v30
  %v84 = vunpack.c.l.b16 %v31
  %v85 = vunpack.c.l.b16 %v32
  %v86 = vunpack.c.l.b16 %v33
  %v87 = vunpack.c.l.b16 %v34
  %v88 = vunpack.c.l.b16 %v35
  %v89 = vpack.c.b16 %v74, %v73
  %v90 = vpack.c.b16 %v76, %v75
  %v91 = vpack.c.b16 %v78, %v77
  %v92 = vpack.c.b16 %v80, %v79
  %v93 = vpack.c.b16 %v82, %v81
  %v94 = vpack.c.b16 %v84, %v83
  %v95 = vpack.c.b16 %v86, %v85
  %v96 = vpack.c.b16 %v88, %v87
  %105 = vmatprep.subr.bf16.mxu0 0
  %106 = vmatpush1.bf16.msra.mxu0 %v89
  %107 = vmatprep.subr.bf16.mxu0 0
  %108 = vmatpush1.bf16.msra.mxu0 %v90
  %109 = vmatprep.subr.bf16.mxu0 0
  %110 = vmatpush1.bf16.msra.mxu0 %v91
  %111 = vmatprep.subr.bf16.mxu0 0
  %112 = vmatpush1.bf16.msra.mxu0 %v92
  %113 = vmatprep.subr.bf16.mxu0 0
  %114 = vmatpush1.bf16.msra.mxu0 %v93
  %115 = vmatprep.subr.bf16.mxu0 0
  %116 = vmatpush1.bf16.msra.mxu0 %v94
  %117 = vmatprep.subr.bf16.mxu0 0
  %118 = vmatpush1.bf16.msra.mxu0 %v95
  %119 = vmatprep.subr.bf16.mxu0 0
  %120 = vmatpush1.bf16.msra.mxu0 %v96
  %121 = vmatprep.subr.bf16.mxu0 0
  %122 = vmatpush1.bf16.msra.mxu0 0
  %123 = vmatprep.subr.bf16.mxu0 0
  %124 = vmatpush1.bf16.msra.mxu0 0
  %125 = vmatprep.subr.bf16.mxu0 0
  %126 = vmatpush1.bf16.msra.mxu0 0
  %127 = vmatprep.subr.bf16.mxu0 0
  %128 = vmatpush1.bf16.msra.mxu0 0
  %129 = vmatprep.subr.bf16.mxu0 0
  %130 = vmatpush1.bf16.msra.mxu0 0
  %131 = vmatprep.subr.bf16.mxu0 0
  %132 = vmatpush1.bf16.msra.mxu0 0
  %133 = vmatprep.subr.bf16.mxu0 0
  %134 = vmatpush1.bf16.msra.mxu0 0
  %135 = vmatprep.subr.bf16.mxu0 0
  %136 = vmatpush1.bf16.msra.mxu0 0
  %137 = vmatprep.mubr.bf16.mxu0 0
  %138 = vmatmul.mubr.bf16.gmra.mrb[0].mxu0 %v51
  %v139 = vpop.f32.mrb[0].mxu0
  %v140 = vadd.f32 %v36, %v139
  %v141 = vpop.f32.mrb[0].mxu0
  %v142 = vpop.f32.mrb[0].mxu0
  %v143 = vadd.f32 %v37, %v142
  %v144 = vpop.f32.mrb[0].mxu0
  %145 = vmatprep.mubr.bf16.mxu0 0
  %146 = vmatmul.mubr.bf16.gmra.mrb[0].mxu0 %v52
  %v147 = vpop.f32.mrb[0].mxu0
  %v148 = vadd.f32 %v38, %v147
  %v149 = vpop.f32.mrb[0].mxu0
  %v150 = vpop.f32.mrb[0].mxu0
  %v151 = vadd.f32 %v39, %v150
  %v152 = vpop.f32.mrb[0].mxu0
  %153 = vmatprep.mubr.bf16.mxu0 0
  %154 = vmatmul.mubr.bf16.gmra.mrb[0].mxu0 %v53
  %v155 = vpop.f32.mrb[0].mxu0
  %v156 = vadd.f32 %v40, %v155
  %v157 = vpop.f32.mrb[0].mxu0
  %v158 = vpop.f32.mrb[0].mxu0
  %v159 = vpop.f32.mrb[0].mxu0
  %160 = vdwg.mxu0
  %vm161 = vcmask 261120
  %162 = vst.msk [vmem:[%s3] sm:$0xff] %vm161, %v140
  %163 = vst.msk [vmem:[%s3 + $0x8] sm:$0xff] %vm161, %v143
  %164 = vst.msk [vmem:[%s3 + $0x10] sm:$0xff] %vm161, %v148
  %165 = vst.msk [vmem:[%s3 + $0x18] sm:$0xff] %vm161, %v151
  %vm166 = vcmask 254976
  %167 = vst.msk [vmem:[%s3 + $0x20] sm:$0x3] %vm166, %v156
  // Predicated region
  $region14: #{tpu_custom_call.1} parent=0 // pred_check
    _
  $region15: #{tpu_custom_call.1} parent=0 // pred_check_branch
    %169 = sbr.rel (0) target = $region17
  $region16: #{tpu_custom_call.1} parent=0 // pred_region
    _
  $region17: #{tpu_custom_call.1} parent=0 // pred_fallthru
    _
  // Predicated region
  $region18: #{tpu_custom_call.1} parent=0 // pred_check
    _
  $region19: #{tpu_custom_call.1} parent=0 // pred_check_branch
    %171 = sbr.rel (0) target = $region21
  $region20: #{tpu_custom_call.1} parent=0 // pred_region
    _
  $region21: #{tpu_custom_call.1} parent=0 // pred_fallthru
    _

</llo_original>
